<compile_context>
chip_gen: v7x
topology: tpu7x:2x2x1
jax: 0.10.0
libtpu: 0.0.40
codegen_flags: <defaults>
</compile_context>

<pallas_src>
import functools

import jax
import jax.numpy as jnp
from jax.experimental import pallas as pl
from jax.experimental.pallas import tpu as pltpu


def _default_bf16_elementwise():
    """bf16 VPU/EUP exists on v6e/v7x (and later); older generations only add converts."""
    try:
        kind = jax.devices()[0].device_kind.lower()
    except Exception:
        return True
    return not any(tag in kind for tag in ("v2", "v3", "v4", "v5"))


def _ffn_res_kernel(x_ref, w_in_ref, w_out_ref, g_hid_ref, o_ref, *, eps, bf16_elementwise):
    k_dim, c_dim, tm = x_ref.shape
    w_in = w_in_ref[...]                      # (H, C) bf16, gamma_in pre-folded
    w_out = w_out_ref[...]                    # (C, H) bf16
    g_hid = g_hid_ref[...]                    # (H, 1) f32
    h_dim = w_in.shape[0]

    # ---- pre-norm statistics: inv_in = rsqrt(mean_c ||x_c||^2 + eps), f32 ----
    sq_in = jnp.zeros((1, tm), jnp.float32)
    for k in range(k_dim):
        xk = x_ref[k].astype(jnp.float32)                                  # (C, TM)
        sq_in = sq_in + jnp.sum(xk * xk, axis=0, keepdims=True)
    inv_in = jax.lax.rsqrt(sq_in * (1.0 / c_dim) + eps)                    # (1, TM)

    # ---- project_in per k + hidden-norm statistics (f32 stats, bf16 MXU operands) ----
    h1 = []
    sq_h = jnp.zeros((1, tm), jnp.float32)
    for k in range(k_dim):
        xs_k = x_ref[k].astype(jnp.float32) * inv_in                       # (C, TM)
        h1_k = jnp.dot(w_in, xs_k.astype(jnp.bfloat16),
                       preferred_element_type=jnp.float32)                 # (H, TM)
        h1.append(h1_k)
        sq_h = sq_h + jnp.sum(h1_k * h1_k, axis=0, keepdims=True)
    inv_h = jax.lax.rsqrt(sq_h * (1.0 / h_dim) + eps)                      # (1, TM)
    scale_h = g_hid * inv_h                                                # (H, TM) f32
    if bf16_elementwise:
        scale_h = scale_h.astype(jnp.bfloat16)

    # ---- per k: hidden scale -> GELU -> project_out -> residual -> store ----
    for k in range(k_dim):
        h1_k = h1[k].astype(jnp.bfloat16) if bf16_elementwise else h1[k]
        h2_k = jax.nn.gelu(h1_k * scale_h, approximate=True)               # (H, TM)
        h3_k = jnp.dot(w_out, h2_k.astype(jnp.bfloat16),
                       preferred_element_type=jnp.float32)                 # (C, TM)
        o_ref[k, :, :] = (h3_k + x_ref[k].astype(jnp.float32)).astype(o_ref.dtype)


def feedforward_residual_block_kcm(x_kcm, w_in, w_out, gamma_in, gamma_hidden,
                                   *, eps=1e-8, tm=2048, bf16_elementwise=None):
    """Core entry point. x_kcm: (K, C, M) with tokens M on the lane axis."""
    K, C, M = x_kcm.shape
    H = w_in.shape[0]
    if bf16_elementwise is None:
        bf16_elementwise = _default_bf16_elementwise()

    # gamma_in is linear and applied before W_in -> fold it into the weight once.
    w_in_eff = (w_in * gamma_in[None, :]).astype(jnp.bfloat16)             # (H, C)
    w_out_bf = w_out.astype(jnp.bfloat16)                                  # (C, H)
    g_hid = gamma_hidden.reshape(H, 1).astype(jnp.float32)

    # Lane tile: large enough to amortize per-step overhead, but clamped so the grid has
    # at least two steps whenever possible (lets v7x shard the "parallel" axis over 2 TCs).
    tm_eff = max(128, pl.cdiv(int(tm), 128) * 128)
    half = max(128, pl.cdiv(pl.cdiv(M, 2), 128) * 128)
    tm_eff = min(tm_eff, half)
    Mp = pl.cdiv(M, tm_eff) * tm_eff
    xp = x_kcm if Mp == M else jnp.pad(x_kcm, ((0, 0), (0, 0), (0, Mp - M)))

    itemsize = jnp.dtype(x_kcm.dtype).itemsize
    cost = pl.CostEstimate(
        flops=4 * H * C * K * M,
        transcendentals=K * H * M,
        bytes_accessed=2 * K * C * M * itemsize + (2 * H * C) * 2 + H * 4,
    )

    kernel = functools.partial(_ffn_res_kernel, eps=eps, bf16_elementwise=bf16_elementwise)
    out = pl.pallas_call(
        kernel,
        out_shape=jax.ShapeDtypeStruct((K, C, Mp), x_kcm.dtype),
        grid=(Mp // tm_eff,),
        in_specs=[
            pl.BlockSpec((K, C, tm_eff), lambda i: (0, 0, i)),   # x tile (lane-dense)
            pl.BlockSpec((H, C), lambda i: (0, 0)),              # W_in (gamma_in folded)
            pl.BlockSpec((C, H), lambda i: (0, 0)),              # W_out
            pl.BlockSpec((H, 1), lambda i: (0, 0)),              # gamma_hidden
        ],
        out_specs=pl.BlockSpec((K, C, tm_eff), lambda i: (0, 0, i)),
        compiler_params=pltpu.CompilerParams(
            dimension_semantics=("parallel",),
            vmem_limit_bytes=32 << 20,
        ),
        cost_estimate=cost,
    )(xp, w_in_eff, w_out_bf, g_hid)

    return out if Mp == M else out[:, :, :M]


def feedforward_residual_block(x, w_in, w_out, gamma_in, gamma_hidden,
                               *, eps=1e-8, tm=2048, bf16_elementwise=None):
    """PyTorch-convention entry: x is (B, N, C, K). Returns same shape/dtype.

    NOTE: this wrapper does a (B,N,C,K) <-> (K,C,M) layout round-trip (two extra HBM
    passes). In a full model keep activations in (K, C, M) and call
    feedforward_residual_block_kcm directly to avoid them.
    """
    B, N, C, K = x.shape
    xt = jnp.transpose(x.reshape(B * N, C, K), (2, 1, 0))        # (K, C, M)
    out = feedforward_residual_block_kcm(xt, w_in, w_out, gamma_in, gamma_hidden,
                                         eps=eps, tm=tm, bf16_elementwise=bf16_elementwise)
    return jnp.transpose(out, (2, 1, 0)).reshape(B, N, C, K)


def _reference(x, w_in, w_out, gamma_in, gamma_hidden, eps=1e-8, bf16_elementwise=True):
    """Pure-JAX reference with matching compute semantics (bf16 MXU operands; optional
    bf16 elementwise in the scale+GELU region)."""
    def coordnorm(v, g):
        sq = jnp.sum(v * v, axis=-1, keepdims=True)                      # (..., C, 1)
        inv = jax.lax.rsqrt(jnp.mean(sq, axis=-2, keepdims=True) + eps)  # (..., 1, 1)
        return v * g[:, None] * inv

    h = coordnorm(x, gamma_in)
    h = jnp.einsum("hc,bnck->bnhk", w_in.astype(jnp.bfloat16), h.astype(jnp.bfloat16),
                   preferred_element_type=jnp.float32)
    h = coordnorm(h, gamma_hidden)
    if bf16_elementwise:
        h = h.astype(jnp.bfloat16)
    h = jax.nn.gelu(h, approximate=True)
    h = jnp.einsum("ch,bnhk->bnck", w_out.astype(jnp.bfloat16), h.astype(jnp.bfloat16),
                   preferred_element_type=jnp.float32)
    return h + x


if __name__ == "__main__":
    B, N = 2, 128          # batch, sequence
    dim_in, mult, K = 16, 4, 3
    dim_hidden = dim_in * mult

    key = jax.random.PRNGKey(0)
    kx, kwi, kwo = jax.random.split(key, 3)

    x = jax.random.normal(kx, (B, N, dim_in, K), dtype=jnp.float32)
    # Parameter init mirroring the module: randn(H, C) / sqrt(C), randn(C, H) / sqrt(H).
    w_in = jax.random.normal(kwi, (dim_hidden, dim_in), dtype=jnp.float32) / jnp.sqrt(
        jnp.float32(dim_in)
    )
    w_out = jax.random.normal(kwo, (dim_in, dim_hidden), dtype=jnp.float32) / jnp.sqrt(
        jnp.float32(dim_hidden)
    )
    gamma_in = jnp.ones((dim_in,), dtype=jnp.float32)          # prenorm scale
    gamma_hidden = jnp.ones((dim_hidden,), dtype=jnp.float32)  # hidden-norm scale

    bf16_ew = _default_bf16_elementwise()

    out = feedforward_residual_block(x, w_in, w_out, gamma_in, gamma_hidden,
                                     bf16_elementwise=bf16_ew)
    out = jax.block_until_ready(out)

    ref = _reference(x, w_in, w_out, gamma_in, gamma_hidden, bf16_elementwise=bf16_ew)
    assert out.shape == x.shape and out.dtype == x.dtype
    max_err = float(jnp.max(jnp.abs(out - ref)))
    assert jnp.allclose(out, ref, atol=2e-2, rtol=2e-2), max_err

    print("KERNEL_OK")
</pallas_src>

<mosaic_0001>
module attributes {stable_mosaic.version = 11 : i64} {
  func.func @_ffn_res_kernel(%arg0: i32, %arg1: memref<3x16x128xf32, #tpu.memory_space<vmem>>, %arg2: memref<64x16xbf16, #tpu.memory_space<vmem>>, %arg3: memref<16x64xbf16, #tpu.memory_space<vmem>>, %arg4: memref<64x1xf32, #tpu.memory_space<vmem>>, %arg5: memref<3x16x128xf32, #tpu.memory_space<vmem>>) attributes {dimension_semantics = [#tpu.dimension_semantics<parallel>], iteration_bounds = array<i64: 2>, scalar_prefetch = 0 : i64, scratch_operands = 0 : i64, tpu.core_type = #tpu.core_type<tc>, window_params = [{transform_indices = @transform_0, window_bounds = array<i64: 3, 16, 128>}, {pipeline_mode = #tpu.pipeline_mode<synchronous>, transform_indices = @transform_1, window_bounds = array<i64: 64, 16>}, {pipeline_mode = #tpu.pipeline_mode<synchronous>, transform_indices = @transform_2, window_bounds = array<i64: 16, 64>}, {pipeline_mode = #tpu.pipeline_mode<synchronous>, transform_indices = @transform_3, window_bounds = array<i64: 64, 1>}, {transform_indices = @transform_4, window_bounds = array<i64: 3, 16, 128>}]} {
    %c0 = arith.constant 0 : index
    %c0_0 = arith.constant 0 : index
    %0 = vector.load %arg2[%c0, %c0_0] : memref<64x16xbf16, #tpu.memory_space<vmem>>, vector<64x16xbf16>
    %c0_1 = arith.constant 0 : index
    %c0_2 = arith.constant 0 : index
    %1 = vector.load %arg3[%c0_1, %c0_2] : memref<16x64xbf16, #tpu.memory_space<vmem>>, vector<16x64xbf16>
    %c0_3 = arith.constant 0 : index
    %c0_4 = arith.constant 0 : index
    %2 = vector.load %arg4[%c0_3, %c0_4] : memref<64x1xf32, #tpu.memory_space<vmem>>, vector<64x1xf32>
    %cst = arith.constant 0.000000e+00 : f32
    %3 = vector.broadcast %cst : f32 to vector<1x128xf32>
    %c0_5 = arith.constant 0 : index
    %c0_6 = arith.constant 0 : index
    %c0_7 = arith.constant 0 : index
    %4 = vector.load %arg1[%c0_5, %c0_6, %c0_7] : memref<3x16x128xf32, #tpu.memory_space<vmem>>, vector<1x16x128xf32>
    %5 = vector.shape_cast %4 : vector<1x16x128xf32> to vector<16x128xf32>
    %6 = arith.mulf %5, %5 : vector<16x128xf32>
    %cst_8 = arith.constant dense<0.000000e+00> : vector<128xf32>
    %7 = vector.multi_reduction <add>, %6, %cst_8 [0] : vector<16x128xf32> to vector<128xf32>
    %8 = vector.shape_cast %7 : vector<128xf32> to vector<1x128xf32>
    %9 = arith.addf %3, %8 : vector<1x128xf32>
    %c1 = arith.constant 1 : index
    %c0_9 = arith.constant 0 : index
    %c0_10 = arith.constant 0 : index
    %10 = vector.load %arg1[%c1, %c0_9, %c0_10] : memref<3x16x128xf32, #tpu.memory_space<vmem>>, vector<1x16x128xf32>
    %11 = vector.shape_cast %10 : vector<1x16x128xf32> to vector<16x128xf32>
    %12 = arith.mulf %11, %11 : vector<16x128xf32>
    %cst_11 = arith.constant dense<0.000000e+00> : vector<128xf32>
    %13 = vector.multi_reduction <add>, %12, %cst_11 [0] : vector<16x128xf32> to vector<128xf32>
    %14 = vector.shape_cast %13 : vector<128xf32> to vector<1x128xf32>
    %15 = arith.addf %9, %14 : vector<1x128xf32>
    %c2 = arith.constant 2 : index
    %c0_12 = arith.constant 0 : index
    %c0_13 = arith.constant 0 : index
    %16 = vector.load %arg1[%c2, %c0_12, %c0_13] : memref<3x16x128xf32, #tpu.memory_space<vmem>>, vector<1x16x128xf32>
    %17 = vector.shape_cast %16 : vector<1x16x128xf32> to vector<16x128xf32>
    %18 = arith.mulf %17, %17 : vector<16x128xf32>
    %cst_14 = arith.constant dense<0.000000e+00> : vector<128xf32>
    %19 = vector.multi_reduction <add>, %18, %cst_14 [0] : vector<16x128xf32> to vector<128xf32>
    %20 = vector.shape_cast %19 : vector<128xf32> to vector<1x128xf32>
    %21 = arith.addf %15, %20 : vector<1x128xf32>
    %cst_15 = arith.constant 6.250000e-02 : f32
    %22 = vector.broadcast %cst_15 : f32 to vector<1x128xf32>
    %23 = arith.mulf %21, %22 : vector<1x128xf32>
    %cst_16 = arith.constant 9.99999993E-9 : f32
    %24 = vector.broadcast %cst_16 : f32 to vector<1x128xf32>
    %25 = arith.addf %23, %24 : vector<1x128xf32>
    %26 = math.rsqrt %25 : vector<1x128xf32>
    %cst_17 = arith.constant 0.000000e+00 : f32
    %27 = vector.broadcast %cst_17 : f32 to vector<1x128xf32>
    %c0_18 = arith.constant 0 : index
    %c0_19 = arith.constant 0 : index
    %c0_20 = arith.constant 0 : index
    %28 = vector.load %arg1[%c0_18, %c0_19, %c0_20] : memref<3x16x128xf32, #tpu.memory_space<vmem>>, vector<1x16x128xf32>
    %29 = vector.shape_cast %28 : vector<1x16x128xf32> to vector<16x128xf32>
    %30 = vector.broadcast %26 : vector<1x128xf32> to vector<16x128xf32>
    %31 = arith.mulf %29, %30 : vector<16x128xf32>
    %32 = arith.truncf %31 : vector<16x128xf32> to vector<16x128xbf16>
    %cst_21 = arith.constant dense<0.000000e+00> : vector<64x128xf32>
    %33 = tpu.matmul %0, %32, %cst_21 {dimension_numbers = #tpu.dot_dimension_numbers<[1], [0], [0], [1], [0, 0, 1, 1], [], []>} : vector<64x16xbf16>, vector<16x128xbf16>, vector<64x128xf32> -> vector<64x128xf32>
    %34 = arith.mulf %33, %33 : vector<64x128xf32>
    %cst_22 = arith.constant dense<0.000000e+00> : vector<128xf32>
    %35 = vector.multi_reduction <add>, %34, %cst_22 [0] : vector<64x128xf32> to vector<128xf32>
    %36 = vector.shape_cast %35 : vector<128xf32> to vector<1x128xf32>
    %37 = arith.addf %27, %36 : vector<1x128xf32>
    %c1_23 = arith.constant 1 : index
    %c0_24 = arith.constant 0 : index
    %c0_25 = arith.constant 0 : index
    %38 = vector.load %arg1[%c1_23, %c0_24, %c0_25] : memref<3x16x128xf32, #tpu.memory_space<vmem>>, vector<1x16x128xf32>
    %39 = vector.shape_cast %38 : vector<1x16x128xf32> to vector<16x128xf32>
    %40 = vector.broadcast %26 : vector<1x128xf32> to vector<16x128xf32>
    %41 = arith.mulf %39, %40 : vector<16x128xf32>
    %42 = arith.truncf %41 : vector<16x128xf32> to vector<16x128xbf16>
    %cst_26 = arith.constant dense<0.000000e+00> : vector<64x128xf32>
    %43 = tpu.matmul %0, %42, %cst_26 {dimension_numbers = #tpu.dot_dimension_numbers<[1], [0], [0], [1], [0, 0, 1, 1], [], []>} : vector<64x16xbf16>, vector<16x128xbf16>, vector<64x128xf32> -> vector<64x128xf32>
    %44 = arith.mulf %43, %43 : vector<64x128xf32>
    %cst_27 = arith.constant dense<0.000000e+00> : vector<128xf32>
    %45 = vector.multi_reduction <add>, %44, %cst_27 [0] : vector<64x128xf32> to vector<128xf32>
    %46 = vector.shape_cast %45 : vector<128xf32> to vector<1x128xf32>
    %47 = arith.addf %37, %46 : vector<1x128xf32>
    %c2_28 = arith.constant 2 : index
    %c0_29 = arith.constant 0 : index
    %c0_30 = arith.constant 0 : index
    %48 = vector.load %arg1[%c2_28, %c0_29, %c0_30] : memref<3x16x128xf32, #tpu.memory_space<vmem>>, vector<1x16x128xf32>
    %49 = vector.shape_cast %48 : vector<1x16x128xf32> to vector<16x128xf32>
    %50 = vector.broadcast %26 : vector<1x128xf32> to vector<16x128xf32>
    %51 = arith.mulf %49, %50 : vector<16x128xf32>
    %52 = arith.truncf %51 : vector<16x128xf32> to vector<16x128xbf16>
    %cst_31 = arith.constant dense<0.000000e+00> : vector<64x128xf32>
    %53 = tpu.matmul %0, %52, %cst_31 {dimension_numbers = #tpu.dot_dimension_numbers<[1], [0], [0], [1], [0, 0, 1, 1], [], []>} : vector<64x16xbf16>, vector<16x128xbf16>, vector<64x128xf32> -> vector<64x128xf32>
    %54 = arith.mulf %53, %53 : vector<64x128xf32>
    %cst_32 = arith.constant dense<0.000000e+00> : vector<128xf32>
    %55 = vector.multi_reduction <add>, %54, %cst_32 [0] : vector<64x128xf32> to vector<128xf32>
    %56 = vector.shape_cast %55 : vector<128xf32> to vector<1x128xf32>
    %57 = arith.addf %47, %56 : vector<1x128xf32>
    %cst_33 = arith.constant 1.562500e-02 : f32
    %58 = vector.broadcast %cst_33 : f32 to vector<1x128xf32>
    %59 = arith.mulf %57, %58 : vector<1x128xf32>
    %cst_34 = arith.constant 9.99999993E-9 : f32
    %60 = vector.broadcast %cst_34 : f32 to vector<1x128xf32>
    %61 = arith.addf %59, %60 : vector<1x128xf32>
    %62 = math.rsqrt %61 : vector<1x128xf32>
    %63 = vector.broadcast %2 : vector<64x1xf32> to vector<64x128xf32>
    %64 = vector.broadcast %62 : vector<1x128xf32> to vector<64x128xf32>
    %65 = arith.mulf %63, %64 : vector<64x128xf32>
    %66 = arith.truncf %65 : vector<64x128xf32> to vector<64x128xbf16>
    %67 = arith.truncf %33 : vector<64x128xf32> to vector<64x128xbf16>
    %68 = arith.mulf %67, %66 : vector<64x128xbf16>
    %69 = arith.mulf %68, %68 : vector<64x128xbf16>
    %70 = arith.mulf %68, %69 : vector<64x128xbf16>
    %cst_35 = arith.constant 4.467770e-02 : bf16
    %71 = vector.broadcast %cst_35 : bf16 to vector<64x128xbf16>
    %72 = arith.mulf %71, %70 : vector<64x128xbf16>
    %73 = arith.addf %68, %72 : vector<64x128xbf16>
    %cst_36 = arith.constant 7.968750e-01 : bf16
    %74 = vector.broadcast %cst_36 : bf16 to vector<64x128xbf16>
    %75 = arith.mulf %74, %73 : vector<64x128xbf16>
    %76 = math.tanh %75 : vector<64x128xbf16>
    %cst_37 = arith.constant 1.000000e+00 : bf16
    %77 = vector.broadcast %cst_37 : bf16 to vector<64x128xbf16>
    %78 = arith.addf %77, %76 : vector<64x128xbf16>
    %cst_38 = arith.constant 5.000000e-01 : bf16
    %79 = vector.broadcast %cst_38 : bf16 to vector<64x128xbf16>
    %80 = arith.mulf %79, %78 : vector<64x128xbf16>
    %81 = arith.mulf %68, %80 : vector<64x128xbf16>
    %cst_39 = arith.constant dense<0.000000e+00> : vector<16x128xf32>
    %82 = tpu.matmul %1, %81, %cst_39 {dimension_numbers = #tpu.dot_dimension_numbers<[1], [0], [0], [1], [0, 0, 1, 1], [], []>} : vector<16x64xbf16>, vector<64x128xbf16>, vector<16x128xf32> -> vector<16x128xf32>
    %c0_40 = arith.constant 0 : index
    %c0_41 = arith.constant 0 : index
    %c0_42 = arith.constant 0 : index
    %83 = vector.load %arg1[%c0_40, %c0_41, %c0_42] : memref<3x16x128xf32, #tpu.memory_space<vmem>>, vector<1x16x128xf32>
    %84 = vector.shape_cast %83 : vector<1x16x128xf32> to vector<16x128xf32>
    %85 = arith.addf %82, %84 : vector<16x128xf32>
    %c0_43 = arith.constant 0 : index
    %c0_44 = arith.constant 0 : index
    %c0_45 = arith.constant 0 : index
    %86 = vector.load %arg5[%c0_43, %c0_44, %c0_45] : memref<3x16x128xf32, #tpu.memory_space<vmem>>, vector<1x16x128xf32>
    %87 = vector.shape_cast %86 : vector<1x16x128xf32> to vector<16x128xf32>
    %88 = vector.shape_cast %85 : vector<16x128xf32> to vector<1x16x128xf32>
    tpu.vector_store %arg5[%c0_43, %c0_44, %c0_45], %88 {strides = array<i32>} : memref<3x16x128xf32, #tpu.memory_space<vmem>>, vector<1x16x128xf32>,
    %89 = arith.truncf %43 : vector<64x128xf32> to vector<64x128xbf16>
    %90 = arith.mulf %89, %66 : vector<64x128xbf16>
    %91 = arith.mulf %90, %90 : vector<64x128xbf16>
    %92 = arith.mulf %90, %91 : vector<64x128xbf16>
    %cst_46 = arith.constant 4.467770e-02 : bf16
    %93 = vector.broadcast %cst_46 : bf16 to vector<64x128xbf16>
    %94 = arith.mulf %93, %92 : vector<64x128xbf16>
    %95 = arith.addf %90, %94 : vector<64x128xbf16>
    %cst_47 = arith.constant 7.968750e-01 : bf16
    %96 = vector.broadcast %cst_47 : bf16 to vector<64x128xbf16>
    %97 = arith.mulf %96, %95 : vector<64x128xbf16>
    %98 = math.tanh %97 : vector<64x128xbf16>
    %cst_48 = arith.constant 1.000000e+00 : bf16
    %99 = vector.broadcast %cst_48 : bf16 to vector<64x128xbf16>
    %100 = arith.addf %99, %98 : vector<64x128xbf16>
    %cst_49 = arith.constant 5.000000e-01 : bf16
    %101 = vector.broadcast %cst_49 : bf16 to vector<64x128xbf16>
    %102 = arith.mulf %101, %100 : vector<64x128xbf16>
    %103 = arith.mulf %90, %102 : vector<64x128xbf16>
    %cst_50 = arith.constant dense<0.000000e+00> : vector<16x128xf32>
    %104 = tpu.matmul %1, %103, %cst_50 {dimension_numbers = #tpu.dot_dimension_numbers<[1], [0], [0], [1], [0, 0, 1, 1], [], []>} : vector<16x64xbf16>, vector<64x128xbf16>, vector<16x128xf32> -> vector<16x128xf32>
    %c1_51 = arith.constant 1 : index
    %c0_52 = arith.constant 0 : index
    %c0_53 = arith.constant 0 : index
    %105 = vector.load %arg1[%c1_51, %c0_52, %c0_53] : memref<3x16x128xf32, #tpu.memory_space<vmem>>, vector<1x16x128xf32>
    %106 = vector.shape_cast %105 : vector<1x16x128xf32> to vector<16x128xf32>
    %107 = arith.addf %104, %106 : vector<16x128xf32>
    %c1_54 = arith.constant 1 : index
    %c0_55 = arith.constant 0 : index
    %c0_56 = arith.constant 0 : index
    %108 = vector.load %arg5[%c1_54, %c0_55, %c0_56] : memref<3x16x128xf32, #tpu.memory_space<vmem>>, vector<1x16x128xf32>
    %109 = vector.shape_cast %108 : vector<1x16x128xf32> to vector<16x128xf32>
    %110 = vector.shape_cast %107 : vector<16x128xf32> to vector<1x16x128xf32>
    tpu.vector_store %arg5[%c1_54, %c0_55, %c0_56], %110 {strides = array<i32>} : memref<3x16x128xf32, #tpu.memory_space<vmem>>, vector<1x16x128xf32>,
    %111 = arith.truncf %53 : vector<64x128xf32> to vector<64x128xbf16>
    %112 = arith.mulf %111, %66 : vector<64x128xbf16>
    %113 = arith.mulf %112, %112 : vector<64x128xbf16>
    %114 = arith.mulf %112, %113 : vector<64x128xbf16>
    %cst_57 = arith.constant 4.467770e-02 : bf16
    %115 = vector.broadcast %cst_57 : bf16 to vector<64x128xbf16>
    %116 = arith.mulf %115, %114 : vector<64x128xbf16>
    %117 = arith.addf %112, %116 : vector<64x128xbf16>
    %cst_58 = arith.constant 7.968750e-01 : bf16
    %118 = vector.broadcast %cst_58 : bf16 to vector<64x128xbf16>
    %119 = arith.mulf %118, %117 : vector<64x128xbf16>
    %120 = math.tanh %119 : vector<64x128xbf16>
    %cst_59 = arith.constant 1.000000e+00 : bf16
    %121 = vector.broadcast %cst_59 : bf16 to vector<64x128xbf16>
    %122 = arith.addf %121, %120 : vector<64x128xbf16>
    %cst_60 = arith.constant 5.000000e-01 : bf16
    %123 = vector.broadcast %cst_60 : bf16 to vector<64x128xbf16>
    %124 = arith.mulf %123, %122 : vector<64x128xbf16>
    %125 = arith.mulf %112, %124 : vector<64x128xbf16>
    %cst_61 = arith.constant dense<0.000000e+00> : vector<16x128xf32>
    %126 = tpu.matmul %1, %125, %cst_61 {dimension_numbers = #tpu.dot_dimension_numbers<[1], [0], [0], [1], [0, 0, 1, 1], [], []>} : vector<16x64xbf16>, vector<64x128xbf16>, vector<16x128xf32> -> vector<16x128xf32>
    %c2_62 = arith.constant 2 : index
    %c0_63 = arith.constant 0 : index
    %c0_64 = arith.constant 0 : index
    %127 = vector.load %arg1[%c2_62, %c0_63, %c0_64] : memref<3x16x128xf32, #tpu.memory_space<vmem>>, vector<1x16x128xf32>
    %128 = vector.shape_cast %127 : vector<1x16x128xf32> to vector<16x128xf32>
    %129 = arith.addf %126, %128 : vector<16x128xf32>
    %c2_65 = arith.constant 2 : index
    %c0_66 = arith.constant 0 : index
    %c0_67 = arith.constant 0 : index
    %130 = vector.load %arg5[%c2_65, %c0_66, %c0_67] : memref<3x16x128xf32, #tpu.memory_space<vmem>>, vector<1x16x128xf32>
    %131 = vector.shape_cast %130 : vector<1x16x128xf32> to vector<16x128xf32>
    %132 = vector.shape_cast %129 : vector<16x128xf32> to vector<1x16x128xf32>
    tpu.vector_store %arg5[%c2_65, %c0_66, %c0_67], %132 {strides = array<i32>} : memref<3x16x128xf32, #tpu.memory_space<vmem>>, vector<1x16x128xf32>,
    return
  }
  func.func @transform_0(%arg0: i32) -> (i32, i32, i32) {
    %c0_i32 = arith.constant 0 : i32
    %c0_i32_0 = arith.constant 0 : i32
    %c0_i32_1 = arith.constant 0 : i32
    return %c0_i32, %c0_i32_0, %arg0 : i32, i32, i32
  }
  func.func @transform_1(%arg0: i32) -> (i32, i32) {
    %c0_i32 = arith.constant 0 : i32
    %c0_i32_0 = arith.constant 0 : i32
    %c0_i32_1 = arith.constant 0 : i32
    return %c0_i32, %c0_i32_0 : i32, i32
  }
  func.func @transform_2(%arg0: i32) -> (i32, i32) {
    %c0_i32 = arith.constant 0 : i32
    %c0_i32_0 = arith.constant 0 : i32
    %c0_i32_1 = arith.constant 0 : i32
    return %c0_i32, %c0_i32_0 : i32, i32
  }
  func.func @transform_3(%arg0: i32) -> (i32, i32) {
    %c0_i32 = arith.constant 0 : i32
    %c0_i32_0 = arith.constant 0 : i32
    %c0_i32_1 = arith.constant 0 : i32
    return %c0_i32, %c0_i32_0 : i32, i32
  }
  func.func @transform_4(%arg0: i32) -> (i32, i32, i32) {
    %c0_i32 = arith.constant 0 : i32
    %c0_i32_0 = arith.constant 0 : i32
    %c0_i32_1 = arith.constant 0 : i32
    return %c0_i32, %c0_i32_0, %arg0 : i32, i32, i32
  }
}

</mosaic_0001>

<llo_original>
// kernel: tpu_custom_call.1
$region0: #{tpu_custom_call.1}
  #allocation0 [shape = 'u32[]', space=smem, size = 0x4, offset = 0x4, fixed_abs, tag = 'smem constant byte address 0x4 - core index']
  #allocation1 [shape = 'u32[144,128]{1,0:T(1,128)}', space=vmem, size = 0x12000, scoped, tag = 'internal scratch']
  %s0 = inlined_call_operand.vmem [shape: f32[3,16,256], index: 0, kind: input, shape index: {}]
  %s1 = inlined_call_operand.vmem [shape: bf16[64,16], index: 1, kind: input, shape index: {}]
  %s2 = inlined_call_operand.vmem [shape: bf16[16,64], index: 2, kind: input, shape index: {}]
  %s3 = inlined_call_operand.vmem [shape: f32[64,1], index: 3, kind: input, shape index: {}]
  %s4 = inlined_call_operand.hbm [shape: f32[3,16,256], index: 4, kind: output, shape index: {}]
  %s5 = sld [smem:[#allocation0]]
  $region87: #{tpu_custom_call.1} parent=0
    _
  %s7 = ssub.s32 1, %s5
  %s8 = scalar_select 0, %s7, %s5
  $region1: #{tpu_custom_call.1} parent=0
    #allocation2 [shape = 'u8[49152]{0}', space=vmem, size = 0xc000, scoped, tag = 'input window, operand 0']
    #allocation3 [shape = 'u8[49152]{0}', space=vmem, size = 0xc000, scoped, tag = 'output window, operand 0']
    #allocation4 [shape = 's32[2]{0}', space=sflag, size = 0x8, scoped, tag = 'scoped memory for tpu_custom_call.1']
    %9 = vsyncpa [#allocation4], 0
    %s10 = scalar_lea.sflag [#allocation4], 1
    %11 = vsyncpa %s10, 0
    loop: start=0, step=1, limit=4
    $region2: #{tpu_custom_call.1} parent=1 // loop_pre_header
      _
    $region3: #{tpu_custom_call.1} parent=1 // loop_header
      %s13 = sphi 0, %s17
      %p14 = scmp.ge.s32.totalorder %s13, 4
      %s23 = sphi 0, %s25
      %s26 = sphi 0, %s23
      %s27 = sphi 0, %s26
      %s43 = sphi 0, %s27
      %s47 = sphi 0, %s47
      %s49 = sphi 0, %s47
      %s50 = sphi 0, %s49
      %s64 = sphi 0, %s50
      %s68 = sphi 0, %s68
      %s70 = sphi 0, %s68
      %s71 = sphi 0, %s70
      %s85 = sphi 0, %s71
      %s89 = sphi 0, %s89
      %s91 = sphi 0, %s89
      %s92 = sphi 0, %s91
      %s106 = sphi 0, %s92
      %s112 = sphi 0, %s114
      %s115 = sphi 0, %s112
      %s116 = sphi 0, %s115
      %s132 = sphi 0, %s116
    $region4: #{tpu_custom_call.1} parent=1 // loop_header_branch
      %16 = sbr.rel (%p14) target = $region8
    $region5: #{tpu_custom_call.1} parent=1 // loop_body
      %s18 = ssub.s32 %s13, 1
      %s19 = ssub.s32 %s13, 2
      %s20 = sadd.s32 %s13, 1
      %s21 = ssub.s32 %s13, %s20
      %p22 = scmp.eq.s32.totalorder %s21, 0
      %s24 = sadd.s32 %s23, 1
      %s25 = scalar_select %p22, %s23, %s24
      %p28 = pneg %p22
      %p29 = scmp.eq.s32.totalorder %s13, 1
      %p30 = por %p28, %p29
      %p31 = scmp.ne.s32.totalorder %s23, %s26
      %p32 = scmp.eq.s32.totalorder %s13, 0
      %p33 = por %p31, %p32
      %p34 = scmp.ne.s32.totalorder %s23, %s26
      %p35 = scmp.eq.s32.totalorder %s18, 1
      %p36 = por %p34, %p35
      %p37 = scmp.ne.s32.totalorder %s26, %s27
      %p38 = scmp.eq.s32.totalorder %s18, 0
      %p39 = por %p37, %p38
      %p40 = scmp.ne.s32.totalorder %s26, %s27
      %p41 = scmp.eq.s32.totalorder %s19, 1
      %p42 = por %p40, %p41
      %p44 = scmp.ne.s32.totalorder %s27, %s43
      %p45 = scmp.eq.s32.totalorder %s19, 0
      %p46 = por %p44, %p45
      %s48 = sadd.s32 %s47, 1
      %p51 = scmp.eq.s32.totalorder %s13, 1
      %p52 = scmp.ne.s32.totalorder %s47, %s49
      %p53 = scmp.eq.s32.totalorder %s13, 0
      %p54 = por %p52, %p53
      %p55 = scmp.ne.s32.totalorder %s47, %s49
      %p56 = scmp.eq.s32.totalorder %s18, 1
      %p57 = por %p55, %p56
      %p58 = scmp.ne.s32.totalorder %s49, %s50
      %p59 = scmp.eq.s32.totalorder %s18, 0
      %p60 = por %p58, %p59
      %p61 = scmp.ne.s32.totalorder %s49, %s50
      %p62 = scmp.eq.s32.totalorder %s19, 1
      %p63 = por %p61, %p62
      %p65 = scmp.ne.s32.totalorder %s50, %s64
      %p66 = scmp.eq.s32.totalorder %s19, 0
      %p67 = por %p65, %p66
      %s69 = sadd.s32 %s68, 1
      %p72 = scmp.eq.s32.totalorder %s13, 1
      %p73 = scmp.ne.s32.totalorder %s68, %s70
      %p74 = scmp.eq.s32.totalorder %s13, 0
      %p75 = por %p73, %p74
      %p76 = scmp.ne.s32.totalorder %s68, %s70
      %p77 = scmp.eq.s32.totalorder %s18, 1
      %p78 = por %p76, %p77
      %p79 = scmp.ne.s32.totalorder %s70, %s71
      %p80 = scmp.eq.s32.totalorder %s18, 0
      %p81 = por %p79, %p80
      %p82 = scmp.ne.s32.totalorder %s70, %s71
      %p83 = scmp.eq.s32.totalorder %s19, 1
      %p84 = por %p82, %p83
      %p86 = scmp.ne.s32.totalorder %s71, %s85
      %p87 = scmp.eq.s32.totalorder %s19, 0
      %p88 = por %p86, %p87
      %s90 = sadd.s32 %s89, 1
      %p93 = scmp.eq.s32.totalorder %s13, 1
      %p94 = scmp.ne.s32.totalorder %s89, %s91
      %p95 = scmp.eq.s32.totalorder %s13, 0
      %p96 = por %p94, %p95
      %p97 = scmp.ne.s32.totalorder %s89, %s91
      %p98 = scmp.eq.s32.totalorder %s18, 1
      %p99 = por %p97, %p98
      %p100 = scmp.ne.s32.totalorder %s91, %s92
      %p101 = scmp.eq.s32.totalorder %s18, 0
      %p102 = por %p100, %p101
      %p103 = scmp.ne.s32.totalorder %s91, %s92
      %p104 = scmp.eq.s32.totalorder %s19, 1
      %p105 = por %p103, %p104
      %p107 = scmp.ne.s32.totalorder %s92, %s106
      %p108 = scmp.eq.s32.totalorder %s19, 0
      %p109 = por %p107, %p108
      %s110 = ssub.s32 %s13, %s20
      %p111 = scmp.eq.s32.totalorder %s110, 0
      %s113 = sadd.s32 %s112, 1
      %s114 = scalar_select %p111, %s112, %s113
      %p117 = pneg %p111
      %p118 = scmp.eq.s32.totalorder %s13, 1
      %p119 = por %p117, %p118
      %p120 = scmp.ne.s32.totalorder %s112, %s115
      %p121 = scmp.eq.s32.totalorder %s13, 0
      %p122 = por %p120, %p121
      %p123 = scmp.ne.s32.totalorder %s112, %s115
      %p124 = scmp.eq.s32.totalorder %s18, 1
      %p125 = por %p123, %p124
      %p126 = scmp.ne.s32.totalorder %s115, %s116
      %p127 = scmp.eq.s32.totalorder %s18, 0
      %p128 = por %p126, %p127
      %p129 = scmp.ne.s32.totalorder %s115, %s116
      %p130 = scmp.eq.s32.totalorder %s19, 1
      %p131 = por %p129, %p130
      %p133 = scmp.ne.s32.totalorder %s116, %s132
      %p134 = scmp.eq.s32.totalorder %s19, 0
      %p135 = por %p133, %p134
      %p136 = scmp.le.s32.totalorder 1, %s13
      %p137 = scmp.lt.s32.totalorder %s13, 3
      %p138 = pnand %p136, %p137
      %p139 = pneg %p138
      // Predicated region
      $region9: #{tpu_custom_call.1} parent=5 // pred_check
        _
      $region10: #{tpu_custom_call.1} parent=5 // pred_check_branch
        %141 = sbr.rel (%p138) target = $region12
      $region11: #{tpu_custom_call.1} parent=5 // pred_region
        %s142 = ssub.s32 %s13, 1
        // Predicated region
        $region13: #{tpu_custom_call.1} parent=11 // pred_check
          %p143 = pneg %p60
        $region14: #{tpu_custom_call.1} parent=11 // pred_check_branch
          %145 = sbr.rel (%p143) target = $region16
        $region15: #{tpu_custom_call.1} parent=11 // pred_region
          _
        $region16: #{tpu_custom_call.1} parent=11 // pred_fallthru
          _
        // Predicated region
        $region17: #{tpu_custom_call.1} parent=11 // pred_check
          %p146 = pneg %p81
        $region18: #{tpu_custom_call.1} parent=11 // pred_check_branch
          %148 = sbr.rel (%p146) target = $region20
        $region19: #{tpu_custom_call.1} parent=11 // pred_region
          _
        $region20: #{tpu_custom_call.1} parent=11 // pred_fallthru
          _
        // Predicated region
        $region21: #{tpu_custom_call.1} parent=11 // pred_check
          %p149 = pneg %p102
        $region22: #{tpu_custom_call.1} parent=11 // pred_check_branch
          %151 = sbr.rel (%p149) target = $region24
        $region23: #{tpu_custom_call.1} parent=11 // pred_region
          _
        $region24: #{tpu_custom_call.1} parent=11 // pred_fallthru
          _
      $region12: #{tpu_custom_call.1} parent=5 // pred_fallthru
        _
      %p152 = scmp.lt.s32.totalorder %s13, 2
      // Predicated region
      $region25: #{tpu_custom_call.1} parent=5 // pred_check
        %p153 = pneg %p152
      $region26: #{tpu_custom_call.1} parent=5 // pred_check_branch
        %155 = sbr.rel (%p153) target = $region28
      $region27: #{tpu_custom_call.1} parent=5 // pred_region
        // Predicated region
        $region29: #{tpu_custom_call.1} parent=27 // pred_check
          %p156 = pneg %p33
        $region30: #{tpu_custom_call.1} parent=27 // pred_check_branch
          %158 = sbr.rel (%p156) target = $region32
        $region31: #{tpu_custom_call.1} parent=27 // pred_region
          %s159 = sand.u32 %s23, 1
          %s160 = sand.u32 %s23, 1
          %s161 = smul.addr %s160, 48
          %s162 = scalar_lea.vmem [#allocation2], %s161
          %s163 = smul.addr %s13, 8
          %s164 = scalar_lea.vmem %s0, %s163
          // Predicated region
          $region33: #{tpu_custom_call.1} parent=31 // pred_check
            _
          $region34: #{tpu_custom_call.1} parent=31 // pred_check_branch
            %166 = sbr.rel (0) target = $region36
          $region35: #{tpu_custom_call.1} parent=31 // pred_region
            // Predicated region
            $region37: #{tpu_custom_call.1} parent=35 // pred_check
              _
            $region38: #{tpu_custom_call.1} parent=35 // pred_check_branch
              %168 = sbr.rel (0) target = $region40
            $region39: #{tpu_custom_call.1} parent=35 // pred_region
              // Predicated region
              $region52: #{tpu_custom_call.1} parent=39 // pred_check
                _
              $region53: #{tpu_custom_call.1} parent=39 // pred_check_branch
                %193 = sbr.rel (0) target = $region55
              $region54: #{tpu_custom_call.1} parent=39 // pred_region
                loop: start=0, step=1, limit=1
                $region56: #{tpu_custom_call.1} parent=54 // loop_pre_header
                  _
                $region57: #{tpu_custom_call.1} parent=54 // loop_header
                  %s195 = sphi 0, %s199
                  %p196 = scmp.ge.s32.totalorder %s195, 1
                  %s200 = sphi %s164, %s164
                  %s201 = sphi %s162, %s162
                $region58: #{tpu_custom_call.1} parent=54 // loop_header_branch
                  %198 = sbr.rel (%p196) target = $region62
                $region59: #{tpu_custom_call.1} parent=54 // loop_body
                  %v202 = vld [vmem:[%s200] sm:$0xff]
                  %203 = vst [vmem:[%s201] sm:$0xff] %v202
                  %v204 = vld [vmem:[%s200 + $0x10] sm:$0xff]
                  %205 = vst [vmem:[%s201 + $0x8] sm:$0xff] %v204
                  %v206 = vld [vmem:[%s200 + $0x20] sm:$0xff]
                  %207 = vst [vmem:[%s201 + $0x10] sm:$0xff] %v206
                  %v208 = vld [vmem:[%s200 + $0x30] sm:$0xff]
                  %209 = vst [vmem:[%s201 + $0x18] sm:$0xff] %v208
                  %v210 = vld [vmem:[%s200 + $0x40] sm:$0xff]
                  %211 = vst [vmem:[%s201 + $0x20] sm:$0xff] %v210
                  %v212 = vld [vmem:[%s200 + $0x50] sm:$0xff]
                  %213 = vst [vmem:[%s201 + $0x28] sm:$0xff] %v212
                $region60: #{tpu_custom_call.1} parent=54 // loop_footer
                  %s199 = sadd.s32 1, %s195
                $region61: #{tpu_custom_call.1} parent=54 // loop_footer_branch
                  %194 = sbr.rel target = $region57
                $region62: #{tpu_custom_call.1} parent=54 // loop_exit
                  _
              $region55: #{tpu_custom_call.1} parent=39 // pred_fallthru
                _
              // Predicated region
              $region63: #{tpu_custom_call.1} parent=39 // pred_check
                _
              $region64: #{tpu_custom_call.1} parent=39 // pred_check_branch
                %215 = sbr.rel target = $region66
              $region65: #{tpu_custom_call.1} parent=39 // pred_region
                _
              $region66: #{tpu_custom_call.1} parent=39 // pred_fallthru
                _
            $region40: #{tpu_custom_call.1} parent=35 // pred_fallthru
              _
            // Predicated region
            $region41: #{tpu_custom_call.1} parent=35 // pred_check
              _
            $region42: #{tpu_custom_call.1} parent=35 // pred_check_branch
              %170 = sbr.rel target = $region44
            $region43: #{tpu_custom_call.1} parent=35 // pred_region
              loop: start=0, step=1, limit=1
              $region45: #{tpu_custom_call.1} parent=43 // loop_pre_header
                _
              $region46: #{tpu_custom_call.1} parent=43 // loop_header
                %s173 = sphi 0, %s177
                %p174 = scmp.ge.s32.totalorder %s173, 1
                %s178 = sphi %s164, %s164
                %s179 = sphi %s162, %s162
              $region47: #{tpu_custom_call.1} parent=43 // loop_header_branch
                %176 = sbr.rel (%p174) target = $region51
              $region48: #{tpu_custom_call.1} parent=43 // loop_body
                %v180 = vld [vmem:[%s178] sm:$0xff]
                %181 = vst [vmem:[%s179] sm:$0xff] %v180
                %v182 = vld [vmem:[%s178 + $0x10] sm:$0xff]
                %183 = vst [vmem:[%s179 + $0x8] sm:$0xff] %v182
                %v184 = vld [vmem:[%s178 + $0x20] sm:$0xff]
                %185 = vst [vmem:[%s179 + $0x10] sm:$0xff] %v184
                %v186 = vld [vmem:[%s178 + $0x30] sm:$0xff]
                %187 = vst [vmem:[%s179 + $0x18] sm:$0xff] %v186
                %v188 = vld [vmem:[%s178 + $0x40] sm:$0xff]
                %189 = vst [vmem:[%s179 + $0x20] sm:$0xff] %v188
                %v190 = vld [vmem:[%s178 + $0x50] sm:$0xff]
                %191 = vst [vmem:[%s179 + $0x28] sm:$0xff] %v190
              $region49: #{tpu_custom_call.1} parent=43 // loop_footer
                %s177 = sadd.s32 1, %s173
              $region50: #{tpu_custom_call.1} parent=43 // loop_footer_branch
                %172 = sbr.rel target = $region46
              $region51: #{tpu_custom_call.1} parent=43 // loop_exit
                _
            $region44: #{tpu_custom_call.1} parent=35 // pred_fallthru
              _
          $region36: #{tpu_custom_call.1} parent=31 // pred_fallthru
            _
          %216 = vnop
        $region32: #{tpu_custom_call.1} parent=27 // pred_fallthru
          _
      $region28: #{tpu_custom_call.1} parent=5 // pred_fallthru
        _
      %p217 = scmp.le.s32.totalorder 1, %s13
      %p218 = scmp.lt.s32.totalorder %s13, 3
      %p219 = pnand %p217, %p218
      %p220 = pneg %p219
      // Predicated region
      $region67: #{tpu_custom_call.1} parent=5 // pred_check
        _
      $region68: #{tpu_custom_call.1} parent=5 // pred_check_branch
        %222 = sbr.rel (%p219) target = $region70
      $region69: #{tpu_custom_call.1} parent=5 // pred_region
        %s223 = ssub.s32 %s13, 1
        %s224 = sand.u32 %s26, 1
        %s225 = sand.u32 %s26, 1
        %s226 = smul.addr %s225, 48
        %s227 = scalar_lea.vmem [#allocation2], %s226
        // Predicated region
        $region71: #{tpu_custom_call.1} parent=69 // pred_check
          %p228 = pneg %p39
        $region72: #{tpu_custom_call.1} parent=69 // pred_check_branch
          %230 = sbr.rel (%p228) target = $region74
        $region73: #{tpu_custom_call.1} parent=69 // pred_region
          _
        $region74: #{tpu_custom_call.1} parent=69 // pred_fallthru
          _
        %s231 = sand.u32 %s26, 1
        %s232 = sand.u32 %s26, 1
        %s233 = smul.addr %s232, 48
        %s234 = scalar_lea.vmem [#allocation2], %s233
        %p235 = pneg %p39
        %p236 = pneg %p36
        %p237 = pneg %p60
        %p238 = pneg %p57
        %p239 = pneg %p81
        %p240 = pneg %p78
        %p241 = pneg %p102
        %p242 = pneg %p99
        %p243 = pneg %p128
        %p244 = pneg %p125
        %s245 = sand.u32 %s115, 1
        %s246 = scalar_lea.sflag [#allocation4], %s245
        %s247 = sand.u32 %s115, 1
        %s248 = smul.addr %s247, 48
        %s249 = scalar_lea.vmem [#allocation3], %s248
        %v255 = vld [vmem:[%s1] sm:$0xf]
        %v256 = vld [vmem:[%s1 + $0x4] sm:$0xf]
        %v257 = vld [vmem:[%s1 + $0x8] sm:$0xf]
        %v258 = vld [vmem:[%s1 + $0xc] sm:$0xf]
        %v259 = vld [vmem:[%s1 + $0x10] sm:$0xf]
        %v260 = vld [vmem:[%s1 + $0x14] sm:$0xf]
        %v261 = vld [vmem:[%s1 + $0x18] sm:$0xf]
        %v262 = vld [vmem:[%s1 + $0x1c] sm:$0xf]
        %v263 = vld [vmem:[%s2] sm:$0xf]
        %v264 = vld [vmem:[%s2 + $0x4] sm:$0xf]
        %v265 = vld [vmem:[%s3] sm:$0xff]
        %v266 = vld [vmem:[%s3 + $0x8] sm:$0xff]
        %v267 = vld [vmem:[%s3 + $0x10] sm:$0xff]
        %v268 = vld [vmem:[%s3 + $0x18] sm:$0xff]
        %v269 = vld [vmem:[%s3 + $0x20] sm:$0xff]
        %v270 = vld [vmem:[%s3 + $0x28] sm:$0xff]
        %v271 = vld [vmem:[%s3 + $0x30] sm:$0xff]
        %v272 = vld [vmem:[%s3 + $0x38] sm:$0xff]
        %v273 = vld [vmem:[%s227] sm:$0xff]
        %v274 = vld [vmem:[%s227 + $0x8] sm:$0xff]
        %v275 = vmul.f32 %v273, %v273
        %v276 = vmul.f32 %v274, %v274
        %v277 = vadd.f32 %v275, %v276
        %v278 = vrot.slane %v277, 4
        %v279 = vadd.f32 %v277, %v278
        %v280 = vrot.slane %v279, 2
        %v281 = vadd.f32 %v279, %v280
        %v282 = vrot.slane %v281, 1
        %v283 = vadd.f32 %v281, %v282
        %v284 = vadd.f32 %v283, 0.0
        %s285 = scalar_lea.vmem %s227, 16 [#allocation2]
        %v286 = vld [vmem:[%s285] sm:$0xff]
        %v287 = vld [vmem:[%s285 + $0x8] sm:$0xff]
        %v288 = vmul.f32 %v286, %v286
        %v289 = vmul.f32 %v287, %v287
        %v290 = vadd.f32 %v288, %v289
        %v291 = vrot.slane %v290, 4
        %v292 = vadd.f32 %v290, %v291
        %v293 = vrot.slane %v292, 2
        %v294 = vadd.f32 %v292, %v293
        %v295 = vrot.slane %v294, 1
        %v296 = vadd.f32 %v294, %v295
        %v297 = vadd.f32 %v284, %v296
        %s298 = scalar_lea.vmem %s227, 32 [#allocation2]
        %v299 = vld [vmem:[%s298] sm:$0xff]
        %v300 = vld [vmem:[%s298 + $0x8] sm:$0xff]
        %v301 = vmul.f32 %v299, %v299
        %v302 = vmul.f32 %v300, %v300
        %v303 = vadd.f32 %v301, %v302
        %v304 = vrot.slane %v303, 4
        %v305 = vadd.f32 %v303, %v304
        %v306 = vrot.slane %v305, 2
        %v307 = vadd.f32 %v305, %v306
        %v308 = vrot.slane %v307, 1
        %v309 = vadd.f32 %v307, %v308
        %v310 = vadd.f32 %v297, %v309
        %v311 = vmul.f32 %v310, 0.0625
        %v312 = vadd.f32 %v311, 1e-08
        %v313 = vrsqrt.pop %v312
        %v314 = vmul.f32 %v273, %v313
        %v315 = vmul.f32 %v274, %v313
        %v316 = vpack.c.bf16 %v315, %v314
        %v325 = vunpack.c.l.b16 %v255
        %v326 = vunpack.c.l.b16 %v256
        %v327 = vunpack.c.l.b16 %v257
        %v328 = vunpack.c.l.b16 %v258
        %v329 = vunpack.c.l.b16 %v259
        %v330 = vunpack.c.l.b16 %v260
        %v331 = vunpack.c.l.b16 %v261
        %v332 = vunpack.c.l.b16 %v262
        %v333 = vpack.c.b16 %v326, %v325
        %v334 = vpack.c.b16 %v328, %v327
        %v335 = vpack.c.b16 %v330, %v329
        %v336 = vpack.c.b16 %v332, %v331
        %vm337 = vcmask 130048
        %v339 = vsel %vm337, %v333, 0
        %v342 = vsel %vm337, %v334, 0
        %v345 = vsel %vm337, %v335, 0
        %v348 = vsel %vm337, %v336, 0
        %350 = vmatprep.subr.bf16.mxu0 0
        %351 = vmatpush1.bf16.msra.mxu0 %v316
        %352 = vmatprep.subr.bf16.mxu0 0
        %353 = vmatpush1.bf16.msra.mxu0 0
        %354 = vmatprep.subr.bf16.mxu0 0
        %355 = vmatpush1.bf16.msra.mxu0 0
        %356 = vmatprep.subr.bf16.mxu0 0
        %357 = vmatpush1.bf16.msra.mxu0 0
        %358 = vmatprep.subr.bf16.mxu0 0
        %359 = vmatpush1.bf16.msra.mxu0 0
        %360 = vmatprep.subr.bf16.mxu0 0
        %361 = vmatpush1.bf16.msra.mxu0 0
        %362 = vmatprep.subr.bf16.mxu0 0
        %363 = vmatpush1.bf16.msra.mxu0 0
        %364 = vmatprep.subr.bf16.mxu0 0
        %365 = vmatpush1.bf16.msra.mxu0 0
        %366 = vmatprep.subr.bf16.mxu0 0
        %367 = vmatpush1.bf16.msra.mxu0 0
        %368 = vmatprep.subr.bf16.mxu0 0
        %369 = vmatpush1.bf16.msra.mxu0 0
        %370 = vmatprep.subr.bf16.mxu0 0
        %371 = vmatpush1.bf16.msra.mxu0 0
        %372 = vmatprep.subr.bf16.mxu0 0
        %373 = vmatpush1.bf16.msra.mxu0 0
        %374 = vmatprep.subr.bf16.mxu0 0
        %375 = vmatpush1.bf16.msra.mxu0 0
        %376 = vmatprep.subr.bf16.mxu0 0
        %377 = vmatpush1.bf16.msra.mxu0 0
        %378 = vmatprep.subr.bf16.mxu0 0
        %379 = vmatpush1.bf16.msra.mxu0 0
        %380 = vmatprep.subr.bf16.mxu0 0
        %381 = vmatpush1.bf16.msra.mxu0 0
        %382 = vmatprep.mubr.bf16.mxu0 0
        %383 = vmatmul.mubr.bf16.gmra.mrb[0].mxu0 %v339
        %v384 = vpop.f32.mrb[0].mxu0
        %v385 = vadd.f32 0.0, %v384
        %v386 = vpop.f32.mrb[0].mxu0
        %v387 = vpop.f32.mrb[0].mxu0
        %v388 = vadd.f32 0.0, %v387
        %v389 = vpop.f32.mrb[0].mxu0
        %390 = vmatprep.mubr.bf16.mxu0 0
        %391 = vmatmul.mubr.bf16.gmra.mrb[0].mxu0 %v342
        %v392 = vpop.f32.mrb[0].mxu0
        %v393 = vadd.f32 0.0, %v392
        %v394 = vpop.f32.mrb[0].mxu0
        %v395 = vpop.f32.mrb[0].mxu0
        %v396 = vadd.f32 0.0, %v395
        %v397 = vpop.f32.mrb[0].mxu0
        %398 = vmatprep.mubr.bf16.mxu0 0
        %399 = vmatmul.mubr.bf16.gmra.mrb[0].mxu0 %v345
        %v400 = vpop.f32.mrb[0].mxu0
        %v401 = vadd.f32 0.0, %v400
        %v402 = vpop.f32.mrb[0].mxu0
        %v403 = vpop.f32.mrb[0].mxu0
        %v404 = vadd.f32 0.0, %v403
        %v405 = vpop.f32.mrb[0].mxu0
        %406 = vmatprep.mubr.bf16.mxu0 0
        %407 = vmatmul.mubr.bf16.gmra.mrb[0].mxu0 %v348
        %v408 = vpop.f32.mrb[0].mxu0
        %v409 = vadd.f32 0.0, %v408
        %v410 = vpop.f32.mrb[0].mxu0
        %v411 = vpop.f32.mrb[0].mxu0
        %v412 = vadd.f32 0.0, %v411
        %v413 = vpop.f32.mrb[0].mxu0
        %414 = vdwg.mxu0
        %v415 = vmul.f32 %v385, %v385
        %v416 = vmul.f32 %v388, %v388
        %v417 = vmul.f32 %v393, %v393
        %v418 = vmul.f32 %v396, %v396
        %v419 = vmul.f32 %v401, %v401
        %v420 = vmul.f32 %v404, %v404
        %v421 = vmul.f32 %v409, %v409
        %v422 = vmul.f32 %v412, %v412
        %v423 = vadd.f32 %v415, %v416
        %v424 = vadd.f32 %v423, %v417
        %v425 = vadd.f32 %v424, %v418
        %v426 = vadd.f32 %v425, %v419
        %v427 = vadd.f32 %v426, %v420
        %v428 = vadd.f32 %v427, %v421
        %v429 = vadd.f32 %v428, %v422
        %v430 = vrot.slane %v429, 4
        %v431 = vadd.f32 %v429, %v430
        %v432 = vrot.slane %v431, 2
        %v433 = vadd.f32 %v431, %v432
        %v434 = vrot.slane %v433, 1
        %v435 = vadd.f32 %v433, %v434
        %v436 = vadd.f32 %v435, 0.0
        %v437 = vmul.f32 %v286, %v313
        %v438 = vmul.f32 %v287, %v313
        %v439 = vpack.c.bf16 %v438, %v437
        %440 = vmatprep.subr.bf16.mxu0 0
        %441 = vmatpush1.bf16.msra.mxu0 %v439
        %442 = vmatprep.subr.bf16.mxu0 0
        %443 = vmatpush1.bf16.msra.mxu0 0
        %444 = vmatprep.subr.bf16.mxu0 0
        %445 = vmatpush1.bf16.msra.mxu0 0
        %446 = vmatprep.subr.bf16.mxu0 0
        %447 = vmatpush1.bf16.msra.mxu0 0
        %448 = vmatprep.subr.bf16.mxu0 0
        %449 = vmatpush1.bf16.msra.mxu0 0
        %450 = vmatprep.subr.bf16.mxu0 0
        %451 = vmatpush1.bf16.msra.mxu0 0
        %452 = vmatprep.subr.bf16.mxu0 0
        %453 = vmatpush1.bf16.msra.mxu0 0
        %454 = vmatprep.subr.bf16.mxu0 0
        %455 = vmatpush1.bf16.msra.mxu0 0
        %456 = vmatprep.subr.bf16.mxu0 0
        %457 = vmatpush1.bf16.msra.mxu0 0
        %458 = vmatprep.subr.bf16.mxu0 0
        %459 = vmatpush1.bf16.msra.mxu0 0
        %460 = vmatprep.subr.bf16.mxu0 0
        %461 = vmatpush1.bf16.msra.mxu0 0
        %462 = vmatprep.subr.bf16.mxu0 0
        %463 = vmatpush1.bf16.msra.mxu0 0
        %464 = vmatprep.subr.bf16.mxu0 0
        %465 = vmatpush1.bf16.msra.mxu0 0
        %466 = vmatprep.subr.bf16.mxu0 0
        %467 = vmatpush1.bf16.msra.mxu0 0
        %468 = vmatprep.subr.bf16.mxu0 0
        %469 = vmatpush1.bf16.msra.mxu0 0
        %470 = vmatprep.subr.bf16.mxu0 0
        %471 = vmatpush1.bf16.msra.mxu0 0
        %472 = vmatprep.mubr.bf16.mxu0 0
        %473 = vmatmul.mubr.bf16.gmra.mrb[0].mxu0 %v339
        %v474 = vpop.f32.mrb[0].mxu0
        %v475 = vadd.f32 0.0, %v474
        %v476 = vpop.f32.mrb[0].mxu0
        %v477 = vpop.f32.mrb[0].mxu0
        %v478 = vadd.f32 0.0, %v477
        %v479 = vpop.f32.mrb[0].mxu0
        %480 = vmatprep.mubr.bf16.mxu0 0
        %481 = vmatmul.mubr.bf16.gmra.mrb[0].mxu0 %v342
        %v482 = vpop.f32.mrb[0].mxu0
        %v483 = vadd.f32 0.0, %v482
        %v484 = vpop.f32.mrb[0].mxu0
        %v485 = vpop.f32.mrb[0].mxu0
        %v486 = vadd.f32 0.0, %v485
        %v487 = vpop.f32.mrb[0].mxu0
        %488 = vmatprep.mubr.bf16.mxu0 0
        %489 = vmatmul.mubr.bf16.gmra.mrb[0].mxu0 %v345
        %v490 = vpop.f32.mrb[0].mxu0
        %v491 = vadd.f32 0.0, %v490
        %v492 = vpop.f32.mrb[0].mxu0
        %v493 = vpop.f32.mrb[0].mxu0
        %v494 = vadd.f32 0.0, %v493
        %v495 = vpop.f32.mrb[0].mxu0
        %496 = vmatprep.mubr.bf16.mxu0 0
        %497 = vmatmul.mubr.bf16.gmra.mrb[0].mxu0 %v348
        %v498 = vpop.f32.mrb[0].mxu0
        %v499 = vadd.f32 0.0, %v498
        %v500 = vpop.f32.mrb[0].mxu0
        %v501 = vpop.f32.mrb[0].mxu0
        %v502 = vadd.f32 0.0, %v501
        %v503 = vpop.f32.mrb[0].mxu0
        %504 = vdwg.mxu0
        %v505 = vmul.f32 %v475, %v475
        %v506 = vmul.f32 %v478, %v478
        %v507 = vmul.f32 %v483, %v483
        %v508 = vmul.f32 %v486, %v486
        %v509 = vmul.f32 %v491, %v491
        %v510 = vmul.f32 %v494, %v494
        %v511 = vmul.f32 %v499, %v499
        %v512 = vmul.f32 %v502, %v502
        %v513 = vadd.f32 %v505, %v506
        %v514 = vadd.f32 %v513, %v507
        %v515 = vadd.f32 %v514, %v508
        %v516 = vadd.f32 %v515, %v509
        %v517 = vadd.f32 %v516, %v510
        %v518 = vadd.f32 %v517, %v511
        %v519 = vadd.f32 %v518, %v512
        %v520 = vrot.slane %v519, 4
        %v521 = vadd.f32 %v519, %v520
        %v522 = vrot.slane %v521, 2
        %v523 = vadd.f32 %v521, %v522
        %v524 = vrot.slane %v523, 1
        %v525 = vadd.f32 %v523, %v524
        %v526 = vadd.f32 %v436, %v525
        %v527 = vmul.f32 %v299, %v313
        %v528 = vmul.f32 %v300, %v313
        %v529 = vpack.c.bf16 %v528, %v527
        %530 = vmatprep.subr.bf16.mxu0 0
        %531 = vmatpush1.bf16.msra.mxu0 %v529
        %532 = vmatprep.subr.bf16.mxu0 0
        %533 = vmatpush1.bf16.msra.mxu0 0
        %534 = vmatprep.subr.bf16.mxu0 0
        %535 = vmatpush1.bf16.msra.mxu0 0
        %536 = vmatprep.subr.bf16.mxu0 0
        %537 = vmatpush1.bf16.msra.mxu0 0
        %538 = vmatprep.subr.bf16.mxu0 0
        %539 = vmatpush1.bf16.msra.mxu0 0
        %540 = vmatprep.subr.bf16.mxu0 0
        %541 = vmatpush1.bf16.msra.mxu0 0
        %542 = vmatprep.subr.bf16.mxu0 0
        %543 = vmatpush1.bf16.msra.mxu0 0
        %544 = vmatprep.subr.bf16.mxu0 0
        %545 = vmatpush1.bf16.msra.mxu0 0
        %546 = vmatprep.subr.bf16.mxu0 0
        %547 = vmatpush1.bf16.msra.mxu0 0
        %548 = vmatprep.subr.bf16.mxu0 0
        %549 = vmatpush1.bf16.msra.mxu0 0
        %550 = vmatprep.subr.bf16.mxu0 0
        %551 = vmatpush1.bf16.msra.mxu0 0
        %552 = vmatprep.subr.bf16.mxu0 0
        %553 = vmatpush1.bf16.msra.mxu0 0
        %554 = vmatprep.subr.bf16.mxu0 0
        %555 = vmatpush1.bf16.msra.mxu0 0
        %556 = vmatprep.subr.bf16.mxu0 0
        %557 = vmatpush1.bf16.msra.mxu0 0
        %558 = vmatprep.subr.bf16.mxu0 0
        %559 = vmatpush1.bf16.msra.mxu0 0
        %560 = vmatprep.subr.bf16.mxu0 0
        %561 = vmatpush1.bf16.msra.mxu0 0
        %562 = vmatprep.mubr.bf16.mxu0 0
        %563 = vmatmul.mubr.bf16.gmra.mrb[0].mxu0 %v339
        %v564 = vpop.f32.mrb[0].mxu0
        %v565 = vadd.f32 0.0, %v564
        %v566 = vpop.f32.mrb[0].mxu0
        %v567 = vpop.f32.mrb[0].mxu0
        %v568 = vadd.f32 0.0, %v567
        %v569 = vpop.f32.mrb[0].mxu0
        %570 = vmatprep.mubr.bf16.mxu0 0
        %571 = vmatmul.mubr.bf16.gmra.mrb[0].mxu0 %v342
        %v572 = vpop.f32.mrb[0].mxu0
        %v573 = vadd.f32 0.0, %v572
        %v574 = vpop.f32.mrb[0].mxu0
        %v575 = vpop.f32.mrb[0].mxu0
        %v576 = vadd.f32 0.0, %v575
        %v577 = vpop.f32.mrb[0].mxu0
        %578 = vmatprep.mubr.bf16.mxu0 0
        %579 = vmatmul.mubr.bf16.gmra.mrb[0].mxu0 %v345
        %v580 = vpop.f32.mrb[0].mxu0
        %v581 = vadd.f32 0.0, %v580
        %v582 = vpop.f32.mrb[0].mxu0
        %v583 = vpop.f32.mrb[0].mxu0
        %v584 = vadd.f32 0.0, %v583
        %v585 = vpop.f32.mrb[0].mxu0
        %586 = vmatprep.mubr.bf16.mxu0 0
        %587 = vmatmul.mubr.bf16.gmra.mrb[0].mxu0 %v348
        %v588 = vpop.f32.mrb[0].mxu0
        %v589 = vadd.f32 0.0, %v588
        %v590 = vpop.f32.mrb[0].mxu0
        %v591 = vpop.f32.mrb[0].mxu0
        %v592 = vadd.f32 0.0, %v591
        %v593 = vpop.f32.mrb[0].mxu0
        %594 = vdwg.mxu0
        %v595 = vmul.f32 %v565, %v565
        %v596 = vmul.f32 %v568, %v568
        %v597 = vmul.f32 %v573, %v573
        %v598 = vmul.f32 %v576, %v576
        %v599 = vmul.f32 %v581, %v581
        %v600 = vmul.f32 %v584, %v584
        %v601 = vmul.f32 %v589, %v589
        %v602 = vmul.f32 %v592, %v592
        %v603 = vadd.f32 %v595, %v596
        %v604 = vadd.f32 %v603, %v597
        %v605 = vadd.f32 %v604, %v598
        %v606 = vadd.f32 %v605, %v599
        %v607 = vadd.f32 %v606, %v600
        %v608 = vadd.f32 %v607, %v601
        %v609 = vadd.f32 %v608, %v602
        %v610 = vrot.slane %v609, 4
        %v611 = vadd.f32 %v609, %v610
        %v612 = vrot.slane %v611, 2
        %v613 = vadd.f32 %v611, %v612
        %v614 = vrot.slane %v613, 1
        %v615 = vadd.f32 %v613, %v614
        %v616 = vadd.f32 %v526, %v615
        %v617 = vmul.f32 %v616, 0.015625
        %v618 = vadd.f32 %v617, 1e-08
        %v619 = vrsqrt.pop %v618
        %621 = vset.pattern.permute.xlu0 0
        %622 = vperm.xlu0 %621, %v265
        %v623 = vpop.permute.xlu0 %622
        %626 = vset.pattern.permute.xlu0 0
        %627 = vperm.xlu0 %626, %v266
        %v628 = vpop.permute.xlu0 %627
        %631 = vset.pattern.permute.xlu0 0
        %632 = vperm.xlu0 %631, %v267
        %v633 = vpop.permute.xlu0 %632
        %636 = vset.pattern.permute.xlu0 0
        %637 = vperm.xlu0 %636, %v268
        %v638 = vpop.permute.xlu0 %637
        %641 = vset.pattern.permute.xlu0 0
        %642 = vperm.xlu0 %641, %v269
        %v643 = vpop.permute.xlu0 %642
        %646 = vset.pattern.permute.xlu0 0
        %647 = vperm.xlu0 %646, %v270
        %v648 = vpop.permute.xlu0 %647
        %651 = vset.pattern.permute.xlu0 0
        %652 = vperm.xlu0 %651, %v271
        %v653 = vpop.permute.xlu0 %652
        %656 = vset.pattern.permute.xlu0 0
        %657 = vperm.xlu0 %656, %v272
        %v658 = vpop.permute.xlu0 %657
        %v660 = vmul.f32 %v623, %v619
        %v661 = vmul.f32 %v628, %v619
        %v662 = vmul.f32 %v633, %v619
        %v663 = vmul.f32 %v638, %v619
        %v664 = vmul.f32 %v643, %v619
        %v665 = vmul.f32 %v648, %v619
        %v666 = vmul.f32 %v653, %v619
        %v667 = vmul.f32 %v658, %v619
        %v668 = vpack.c.bf16 %v661, %v660
        %v669 = vpack.c.bf16 %v663, %v662
        %v670 = vpack.c.bf16 %v665, %v664
        %v671 = vpack.c.bf16 %v667, %v666
        %v672 = vpack.c.bf16 %v388, %v385
        %v673 = vpack.c.bf16 %v396, %v393
        %v674 = vpack.c.bf16 %v404, %v401
        %v675 = vpack.c.bf16 %v412, %v409
        %v676 = vmul.bf16 %v672, %v668
        %v677 = vmul.bf16 %v673, %v669
        %v678 = vmul.bf16 %v674, %v670
        %v679 = vmul.bf16 %v675, %v671
        %v680 = vmul.bf16 %v676, %v676
        %v681 = vmul.bf16 %v677, %v677
        %v682 = vmul.bf16 %v678, %v678
        %v683 = vmul.bf16 %v679, %v679
        %v684 = vmul.bf16 %v676, %v680
        %v685 = vmul.bf16 %v677, %v681
        %v686 = vmul.bf16 %v678, %v682
        %v687 = vmul.bf16 %v679, %v683
        %v688 = vmul.bf16 %v684, 1027030327
        %v689 = vmul.bf16 %v685, 1027030327
        %v690 = vmul.bf16 %v686, 1027030327
        %v691 = vmul.bf16 %v687, 1027030327
        %v692 = vadd.bf16 %v676, %v688
        %v693 = vadd.bf16 %v677, %v689
        %v694 = vadd.bf16 %v678, %v690
        %v695 = vadd.bf16 %v679, %v691
        %v696 = vmul.bf16 %v692, 1061961548
        %v697 = vmul.bf16 %v693, 1061961548
        %v698 = vmul.bf16 %v694, 1061961548
        %v699 = vmul.bf16 %v695, 1061961548
        %v700 = vtanh.bf16.pop %v696
        %v701 = vtanh.bf16.pop %v697
        %v702 = vtanh.bf16.pop %v698
        %v703 = vtanh.bf16.pop %v699
        %v704 = vadd.bf16 %v700, 1065369472
        %v705 = vadd.bf16 %v701, 1065369472
        %v706 = vadd.bf16 %v702, 1065369472
        %v707 = vadd.bf16 %v703, 1065369472
        %v708 = vmul.bf16 %v704, 1056980736
        %v709 = vmul.bf16 %v705, 1056980736
        %v710 = vmul.bf16 %v706, 1056980736
        %v711 = vmul.bf16 %v707, 1056980736
        %v712 = vmul.bf16 %v676, %v708
        %v713 = vmul.bf16 %v677, %v709
        %v714 = vmul.bf16 %v678, %v710
        %v715 = vmul.bf16 %v679, %v711
        %v718 = vunpack.c.l.b16 %v263
        %v719 = vunpack.c.l.b16 %v264
        %v720 = vpack.c.b16 %v719, %v718
        %vm721 = vcmask 523264
        %v723 = vsel %vm721, %v720, 0
        %725 = vmatprep.subr.bf16.mxu0 0
        %726 = vmatpush1.bf16.msra.mxu0 %v712
        %727 = vmatprep.subr.bf16.mxu0 0
        %728 = vmatpush1.bf16.msra.mxu0 %v713
        %729 = vmatprep.subr.bf16.mxu0 0
        %730 = vmatpush1.bf16.msra.mxu0 %v714
        %731 = vmatprep.subr.bf16.mxu0 0
        %732 = vmatpush1.bf16.msra.mxu0 %v715
        %733 = vmatprep.subr.bf16.mxu0 0
        %734 = vmatpush1.bf16.msra.mxu0 0
        %735 = vmatprep.subr.bf16.mxu0 0
        %736 = vmatpush1.bf16.msra.mxu0 0
        %737 = vmatprep.subr.bf16.mxu0 0
        %738 = vmatpush1.bf16.msra.mxu0 0
        %739 = vmatprep.subr.bf16.mxu0 0
        %740 = vmatpush1.bf16.msra.mxu0 0
        %741 = vmatprep.subr.bf16.mxu0 0
        %742 = vmatpush1.bf16.msra.mxu0 0
        %743 = vmatprep.subr.bf16.mxu0 0
        %744 = vmatpush1.bf16.msra.mxu0 0
        %745 = vmatprep.subr.bf16.mxu0 0
        %746 = vmatpush1.bf16.msra.mxu0 0
        %747 = vmatprep.subr.bf16.mxu0 0
        %748 = vmatpush1.bf16.msra.mxu0 0
        %749 = vmatprep.subr.bf16.mxu0 0
        %750 = vmatpush1.bf16.msra.mxu0 0
        %751 = vmatprep.subr.bf16.mxu0 0
        %752 = vmatpush1.bf16.msra.mxu0 0
        %753 = vmatprep.subr.bf16.mxu0 0
        %754 = vmatpush1.bf16.msra.mxu0 0
        %755 = vmatprep.subr.bf16.mxu0 0
        %756 = vmatpush1.bf16.msra.mxu0 0
        %757 = vmatprep.mubr.bf16.mxu0 0
        %758 = vmatmul.mubr.bf16.gmra.mrb[0].mxu0 %v723
        %v759 = vpop.f32.mrb[0].mxu0
        %v760 = vadd.f32 %v273, %v759
        %v761 = vpop.f32.mrb[0].mxu0
        %v762 = vpop.f32.mrb[0].mxu0
        %v763 = vadd.f32 %v274, %v762
        %v764 = vpop.f32.mrb[0].mxu0
        %765 = vdwg.mxu0
        %766 = vst [vmem:[%s249] sm:$0xff] %v760
        %767 = vst [vmem:[%s249 + $0x8] sm:$0xff] %v763
        %v768 = vpack.c.bf16 %v478, %v475
        %v769 = vpack.c.bf16 %v486, %v483
        %v770 = vpack.c.bf16 %v494, %v491
        %v771 = vpack.c.bf16 %v502, %v499
        %v772 = vmul.bf16 %v768, %v668
        %v773 = vmul.bf16 %v769, %v669
        %v774 = vmul.bf16 %v770, %v670
        %v775 = vmul.bf16 %v771, %v671
        %v776 = vmul.bf16 %v772, %v772
        %v777 = vmul.bf16 %v773, %v773
        %v778 = vmul.bf16 %v774, %v774
        %v779 = vmul.bf16 %v775, %v775
        %v780 = vmul.bf16 %v772, %v776
        %v781 = vmul.bf16 %v773, %v777
        %v782 = vmul.bf16 %v774, %v778
        %v783 = vmul.bf16 %v775, %v779
        %v784 = vmul.bf16 %v780, 1027030327
        %v785 = vmul.bf16 %v781, 1027030327
        %v786 = vmul.bf16 %v782, 1027030327
        %v787 = vmul.bf16 %v783, 1027030327
        %v788 = vadd.bf16 %v772, %v784
        %v789 = vadd.bf16 %v773, %v785
        %v790 = vadd.bf16 %v774, %v786
        %v791 = vadd.bf16 %v775, %v787
        %v792 = vmul.bf16 %v788, 1061961548
        %v793 = vmul.bf16 %v789, 1061961548
        %v794 = vmul.bf16 %v790, 1061961548
        %v795 = vmul.bf16 %v791, 1061961548
        %v796 = vtanh.bf16.pop %v792
        %v797 = vtanh.bf16.pop %v793
        %v798 = vtanh.bf16.pop %v794
        %v799 = vtanh.bf16.pop %v795
        %v800 = vadd.bf16 %v796, 1065369472
        %v801 = vadd.bf16 %v797, 1065369472
        %v802 = vadd.bf16 %v798, 1065369472
        %v803 = vadd.bf16 %v799, 1065369472
        %v804 = vmul.bf16 %v800, 1056980736
        %v805 = vmul.bf16 %v801, 1056980736
        %v806 = vmul.bf16 %v802, 1056980736
        %v807 = vmul.bf16 %v803, 1056980736
        %v808 = vmul.bf16 %v772, %v804
        %v809 = vmul.bf16 %v773, %v805
        %v810 = vmul.bf16 %v774, %v806
        %v811 = vmul.bf16 %v775, %v807
        %v812 = vld [vmem:[%s285] sm:$0xff]
        %v813 = vld [vmem:[%s285 + $0x8] sm:$0xff]
        %814 = vmatprep.subr.bf16.mxu0 0
        %815 = vmatpush1.bf16.msra.mxu0 %v808
        %816 = vmatprep.subr.bf16.mxu0 0
        %817 = vmatpush1.bf16.msra.mxu0 %v809
        %818 = vmatprep.subr.bf16.mxu0 0
        %819 = vmatpush1.bf16.msra.mxu0 %v810
        %820 = vmatprep.subr.bf16.mxu0 0
        %821 = vmatpush1.bf16.msra.mxu0 %v811
        %822 = vmatprep.subr.bf16.mxu0 0
        %823 = vmatpush1.bf16.msra.mxu0 0
        %824 = vmatprep.subr.bf16.mxu0 0
        %825 = vmatpush1.bf16.msra.mxu0 0
        %826 = vmatprep.subr.bf16.mxu0 0
        %827 = vmatpush1.bf16.msra.mxu0 0
        %828 = vmatprep.subr.bf16.mxu0 0
        %829 = vmatpush1.bf16.msra.mxu0 0
        %830 = vmatprep.subr.bf16.mxu0 0
        %831 = vmatpush1.bf16.msra.mxu0 0
        %832 = vmatprep.subr.bf16.mxu0 0
        %833 = vmatpush1.bf16.msra.mxu0 0
        %834 = vmatprep.subr.bf16.mxu0 0
        %835 = vmatpush1.bf16.msra.mxu0 0
        %836 = vmatprep.subr.bf16.mxu0 0
        %837 = vmatpush1.bf16.msra.mxu0 0
        %838 = vmatprep.subr.bf16.mxu0 0
        %839 = vmatpush1.bf16.msra.mxu0 0
        %840 = vmatprep.subr.bf16.mxu0 0
        %841 = vmatpush1.bf16.msra.mxu0 0
        %842 = vmatprep.subr.bf16.mxu0 0
        %843 = vmatpush1.bf16.msra.mxu0 0
        %844 = vmatprep.subr.bf16.mxu0 0
        %845 = vmatpush1.bf16.msra.mxu0 0
        %846 = vmatprep.mubr.bf16.mxu0 0
        %847 = vmatmul.mubr.bf16.gmra.mrb[0].mxu0 %v723
        %v848 = vpop.f32.mrb[0].mxu0
        %v849 = vadd.f32 %v812, %v848
        %v850 = vpop.f32.mrb[0].mxu0
        %v851 = vpop.f32.mrb[0].mxu0
        %v852 = vadd.f32 %v813, %v851
        %v853 = vpop.f32.mrb[0].mxu0
        %854 = vdwg.mxu0
        %s855 = scalar_lea.vmem %s249, 16 [#allocation3]
        %856 = vst [vmem:[%s855] sm:$0xff] %v849
        %857 = vst [vmem:[%s855 + $0x8] sm:$0xff] %v852
        %v858 = vpack.c.bf16 %v568, %v565
        %v859 = vpack.c.bf16 %v576, %v573
        %v860 = vpack.c.bf16 %v584, %v581
        %v861 = vpack.c.bf16 %v592, %v589
        %v862 = vmul.bf16 %v858, %v668
        %v863 = vmul.bf16 %v859, %v669
        %v864 = vmul.bf16 %v860, %v670
        %v865 = vmul.bf16 %v861, %v671
        %v866 = vmul.bf16 %v862, %v862
        %v867 = vmul.bf16 %v863, %v863
        %v868 = vmul.bf16 %v864, %v864
        %v869 = vmul.bf16 %v865, %v865
        %v870 = vmul.bf16 %v862, %v866
        %v871 = vmul.bf16 %v863, %v867
        %v872 = vmul.bf16 %v864, %v868
        %v873 = vmul.bf16 %v865, %v869
        %v874 = vmul.bf16 %v870, 1027030327
        %v875 = vmul.bf16 %v871, 1027030327
        %v876 = vmul.bf16 %v872, 1027030327
        %v877 = vmul.bf16 %v873, 1027030327
        %v878 = vadd.bf16 %v862, %v874
        %v879 = vadd.bf16 %v863, %v875
        %v880 = vadd.bf16 %v864, %v876
        %v881 = vadd.bf16 %v865, %v877
        %v882 = vmul.bf16 %v878, 1061961548
        %v883 = vmul.bf16 %v879, 1061961548
        %v884 = vmul.bf16 %v880, 1061961548
        %v885 = vmul.bf16 %v881, 1061961548
        %v886 = vtanh.bf16.pop %v882
        %v887 = vtanh.bf16.pop %v883
        %v888 = vtanh.bf16.pop %v884
        %v889 = vtanh.bf16.pop %v885
        %v890 = vadd.bf16 %v886, 1065369472
        %v891 = vadd.bf16 %v887, 1065369472
        %v892 = vadd.bf16 %v888, 1065369472
        %v893 = vadd.bf16 %v889, 1065369472
        %v894 = vmul.bf16 %v890, 1056980736
        %v895 = vmul.bf16 %v891, 1056980736
        %v896 = vmul.bf16 %v892, 1056980736
        %v897 = vmul.bf16 %v893, 1056980736
        %v898 = vmul.bf16 %v862, %v894
        %v899 = vmul.bf16 %v863, %v895
        %v900 = vmul.bf16 %v864, %v896
        %v901 = vmul.bf16 %v865, %v897
        %v902 = vld [vmem:[%s298] sm:$0xff]
        %v903 = vld [vmem:[%s298 + $0x8] sm:$0xff]
        %904 = vmatprep.subr.bf16.mxu0 0
        %905 = vmatpush1.bf16.msra.mxu0 %v898
        %906 = vmatprep.subr.bf16.mxu0 0
        %907 = vmatpush1.bf16.msra.mxu0 %v899
        %908 = vmatprep.subr.bf16.mxu0 0
        %909 = vmatpush1.bf16.msra.mxu0 %v900
        %910 = vmatprep.subr.bf16.mxu0 0
        %911 = vmatpush1.bf16.msra.mxu0 %v901
        %912 = vmatprep.subr.bf16.mxu0 0
        %913 = vmatpush1.bf16.msra.mxu0 0
        %914 = vmatprep.subr.bf16.mxu0 0
        %915 = vmatpush1.bf16.msra.mxu0 0
        %916 = vmatprep.subr.bf16.mxu0 0
        %917 = vmatpush1.bf16.msra.mxu0 0
        %918 = vmatprep.subr.bf16.mxu0 0
        %919 = vmatpush1.bf16.msra.mxu0 0
        %920 = vmatprep.subr.bf16.mxu0 0
        %921 = vmatpush1.bf16.msra.mxu0 0
        %922 = vmatprep.subr.bf16.mxu0 0
        %923 = vmatpush1.bf16.msra.mxu0 0
        %924 = vmatprep.subr.bf16.mxu0 0
        %925 = vmatpush1.bf16.msra.mxu0 0
        %926 = vmatprep.subr.bf16.mxu0 0
        %927 = vmatpush1.bf16.msra.mxu0 0
        %928 = vmatprep.subr.bf16.mxu0 0
        %929 = vmatpush1.bf16.msra.mxu0 0
        %930 = vmatprep.subr.bf16.mxu0 0
        %931 = vmatpush1.bf16.msra.mxu0 0
        %932 = vmatprep.subr.bf16.mxu0 0
        %933 = vmatpush1.bf16.msra.mxu0 0
        %934 = vmatprep.subr.bf16.mxu0 0
        %935 = vmatpush1.bf16.msra.mxu0 0
        %936 = vmatprep.mubr.bf16.mxu0 0
        %937 = vmatmul.mubr.bf16.gmra.mrb[0].mxu0 %v723
        %v938 = vpop.f32.mrb[0].mxu0
        %v939 = vadd.f32 %v902, %v938
        %v940 = vpop.f32.mrb[0].mxu0
        %v941 = vpop.f32.mrb[0].mxu0
        %v942 = vadd.f32 %v903, %v941
        %v943 = vpop.f32.mrb[0].mxu0
        %944 = vdwg.mxu0
        %s945 = scalar_lea.vmem %s249, 32 [#allocation3]
        %946 = vst [vmem:[%s945] sm:$0xff] %v939
        %947 = vst [vmem:[%s945 + $0x8] sm:$0xff] %v942
        %s948 = sand.u32 %s115, 1
        %s949 = scalar_lea.sflag [#allocation4], %s948
        %s950 = sand.u32 %s115, 1
        %s951 = smul.addr %s950, 48
        %s952 = scalar_lea.vmem [#allocation3], %s951
        // Predicated region
        $region75: #{tpu_custom_call.1} parent=69 // pred_check
          %p953 = pneg %p125
        $region76: #{tpu_custom_call.1} parent=69 // pred_check_branch
          %955 = sbr.rel (%p953) target = $region78
        $region77: #{tpu_custom_call.1} parent=69 // pred_region
          %s957 = ssub.s32 768, 768
          %958 = vsyncadd %s949, %s957
          %s959 = smul.addr %s18, 128
          %s960 = scalar_lea.hbm %s4, %s959
          %s961 = sshll.u32 %s952, 4
          %s962 = int_to_ptr.vmem [resolvable:$true] %s961
          %967 = dma.vmem_to_hbm [thread:$0]  %s962, 768, %s960, %s949, 128, 256, 8
        $region78: #{tpu_custom_call.1} parent=69 // pred_fallthru
          _
      $region70: #{tpu_custom_call.1} parent=5 // pred_fallthru
        _
      %p968 = scmp.le.s32.totalorder 2, %s13
      // Predicated region
      $region79: #{tpu_custom_call.1} parent=5 // pred_check
        %p969 = pneg %p968
      $region80: #{tpu_custom_call.1} parent=5 // pred_check_branch
        %971 = sbr.rel (%p969) target = $region82
      $region81: #{tpu_custom_call.1} parent=5 // pred_region
        %s972 = ssub.s32 %s13, 2
        // Predicated region
        $region83: #{tpu_custom_call.1} parent=81 // pred_check
          %p973 = pneg %p131
        $region84: #{tpu_custom_call.1} parent=81 // pred_check_branch
          %975 = sbr.rel (%p973) target = $region86
        $region85: #{tpu_custom_call.1} parent=81 // pred_region
          %s976 = sand.u32 %s116, 1
          %s977 = scalar_lea.sflag [#allocation4], %s976
          %s978 = sand.u32 %s116, 1
          %s979 = smul.addr %s978, 48
          %s980 = scalar_lea.vmem [#allocation3], %s979
          %981 = dma.done %s977, 768
        $region86: #{tpu_custom_call.1} parent=81 // pred_fallthru
          _
      $region82: #{tpu_custom_call.1} parent=5 // pred_fallthru
        _
    $region6: #{tpu_custom_call.1} parent=1 // loop_footer
      %s17 = sadd.s32 1, %s13
    $region7: #{tpu_custom_call.1} parent=1 // loop_footer_branch
      %12 = sbr.rel target = $region3
    $region8: #{tpu_custom_call.1} parent=1 // loop_exit
      _
    %982 = vsyncpa [#allocation4], 1
    %s983 = scalar_lea.sflag [#allocation4], 1
    %984 = vsyncpa %s983, 1

</llo_original>
